<compile_context>
chip_gen: v6e
topology: v6e:2x2x1
jax: 0.10.0
libtpu: 0.0.40
codegen_flags: <defaults>
</compile_context>

<pallas_src>
import functools

import jax
import jax.numpy as jnp
from jax.experimental import pallas as pl
from jax.experimental.pallas import tpu as pltpu

LANES = 128            # vreg lane width
MAX_BLOCK_ROWS = 2048  # 2048 x 128 x 4B = 1 MiB per f32 input block


def _mixed_loss_partial_kernel(x_ref, y_ref, ce_ref, sq_ref, *,
                               a, total_rows, block_rows, ragged):
    """One independent grid step: reduce a (block_rows, 128) tile of x/y down
    to vreg-shaped (8, 128) partial sums for the CE and squared-error terms.

    ce_ref : (8,128) f32 output block  (sum of y * log(x + 1e-10))
    sq_ref : (8,128) f32 output block  (sum of (x - a)^2)
    """
    x = x_ref[...].astype(jnp.float32)
    y = y_ref[...].astype(jnp.float32)

    if ragged:
        # Mask rows past the true extent (last partial block): x -> a, y -> 0
        # contribute exactly zero to both terms.
        base = pl.program_id(0) * block_rows
        row_ids = base + jax.lax.broadcasted_iota(
            jnp.int32, (block_rows, LANES), 0)
        valid = row_ids < total_rows
        x = jnp.where(valid, x, a)
        y = jnp.where(valid, y, 0.0)

    # Split rows into (n_vregs, 8, 128) and reduce over the major axis:
    # pure cross-vreg elementwise adds on the VPU (no XLU in the hot path).
    x3 = x.reshape(-1, 8, LANES)
    y3 = y.reshape(-1, 8, LANES)
    ce_ref[...] = jnp.sum(y3 * jnp.log(x3 + 1e-10), axis=0)
    sq_ref[...] = jnp.sum((x3 - a) ** 2, axis=0)


def mixed_loss(x, y, t, num=2):
    """Pallas implementation of MixedLoss(num).forward(x, y, t). Returns a scalar."""
    a = 1.0 / num

    # Flatten to a lane-dense (rows, 128) slab; keep native dtype (cast in-kernel).
    xf = x.reshape(-1)
    yf = y.reshape(-1)
    n = xf.shape[0]
    lane_pad = (-n) % LANES
    if lane_pad:
        # Fallback only for sizes not divisible by 128 (not hit by the demo);
        # pad values contribute exactly zero to both terms.
        xf = jnp.concatenate([xf, jnp.full((lane_pad,), a, xf.dtype)])
        yf = jnp.concatenate([yf, jnp.zeros((lane_pad,), yf.dtype)])
    rows = xf.shape[0] // LANES
    x2 = xf.reshape(rows, LANES)
    y2 = yf.reshape(rows, LANES)

    # Sublane granularity: 8 rows per vreg for 4-byte dtypes, 16 for 2-byte, ...
    itemsize = min(jnp.dtype(x2.dtype).itemsize, jnp.dtype(y2.dtype).itemsize)
    sub = 8 * max(1, 4 // itemsize)
    block_rows = min(MAX_BLOCK_ROWS, ((rows + sub - 1) // sub) * sub)
    num_blocks = pl.cdiv(rows, block_rows)
    ragged = (rows % block_rows) != 0

    kernel = functools.partial(
        _mixed_loss_partial_kernel,
        a=a, total_rows=rows, block_rows=block_rows, ragged=ragged)

    ce_part, sq_part = pl.pallas_call(
        kernel,
        out_shape=(
            jax.ShapeDtypeStruct((num_blocks * 8, LANES), jnp.float32),
            jax.ShapeDtypeStruct((num_blocks * 8, LANES), jnp.float32),
        ),
        grid_spec=pltpu.PrefetchScalarGridSpec(
            num_scalar_prefetch=0,
            grid=(num_blocks,),
            in_specs=[
                pl.BlockSpec((block_rows, LANES), lambda i: (i, 0)),  # x tile
                pl.BlockSpec((block_rows, LANES), lambda i: (i, 0)),  # y tile
            ],
            out_specs=[
                pl.BlockSpec((8, LANES), lambda i: (i, 0)),  # CE partial sums
                pl.BlockSpec((8, LANES), lambda i: (i, 0)),  # SQ partial sums
            ],
        ),
        compiler_params=pltpu.CompilerParams(
            dimension_semantics=("parallel",)),  # independent blocks -> v7x 2-TC
    )(x2, y2)

    # Tiny epilogue in XLA: reduce the vreg partials and mix with the scalar t.
    t = jnp.asarray(t, jnp.float32)
    ce = jnp.sum(ce_part)
    sq = jnp.sum(sq_part)
    return -t * ce + (1.0 - t) * sq


if __name__ == "__main__":
    key = jax.random.PRNGKey(0)
    kx, ky, kt = jax.random.split(key, 3)

    B, C, H, W = 2, 4, 16, 16
    # x: positive "probabilities" (softmax over channel dim, like a seg net output)
    x = jax.nn.softmax(jax.random.normal(kx, (B, C, H, W), jnp.float32), axis=1)
    # y: soft one-hot-ish targets
    y = jax.nn.softmax(jax.random.normal(ky, (B, C, H, W), jnp.float32) * 4.0, axis=1)
    # t: scalar mixing weight
    t = jnp.float32(0.7)

    loss = jax.block_until_ready(mixed_loss(x, y, t, num=2))

    # pure-JAX reference
    a = 1.0 / 2
    ref = -t * jnp.sum(y * jnp.log(x + 1e-10)) + (1.0 - t) * jnp.sum((x - a) ** 2)
    ref = jax.block_until_ready(ref)

    assert jnp.allclose(loss, ref, rtol=1e-5, atol=1e-3), (loss, ref)
    print("KERNEL_OK")
</pallas_src>

<mosaic_0001>
module attributes {stable_mosaic.version = 11 : i64} {
  func.func @_mixed_loss_partial_kernel(%arg0: i32, %arg1: memref<16x128xf32, #tpu.memory_space<vmem>>, %arg2: memref<16x128xf32, #tpu.memory_space<vmem>>, %arg3: memref<8x128xf32, #tpu.memory_space<vmem>>, %arg4: memref<8x128xf32, #tpu.memory_space<vmem>>) attributes {dimension_semantics = [#tpu.dimension_semantics<parallel>], iteration_bounds = array<i64: 1>, scalar_prefetch = 0 : i64, scratch_operands = 0 : i64, tpu.core_type = #tpu.core_type<tc>, window_params = [{transform_indices = @transform_0, window_bounds = array<i64: 16, 128>}, {transform_indices = @transform_1, window_bounds = array<i64: 16, 128>}, {transform_indices = @transform_2, window_bounds = array<i64: 8, 128>}, {transform_indices = @transform_3, window_bounds = array<i64: 8, 128>}]} {
    %c0 = arith.constant 0 : index
    %c0_0 = arith.constant 0 : index
    %0 = vector.load %arg1[%c0, %c0_0] : memref<16x128xf32, #tpu.memory_space<vmem>>, vector<16x128xf32>
    %c0_1 = arith.constant 0 : index
    %c0_2 = arith.constant 0 : index
    %1 = vector.load %arg2[%c0_1, %c0_2] : memref<16x128xf32, #tpu.memory_space<vmem>>, vector<16x128xf32>
    %2 = vector.shape_cast %0 : vector<16x128xf32> to vector<2x8x128xf32>
    %3 = vector.shape_cast %1 : vector<16x128xf32> to vector<2x8x128xf32>
    %cst = arith.constant 1.000000e-10 : f32
    %4 = vector.broadcast %cst : f32 to vector<2x8x128xf32>
    %5 = arith.addf %2, %4 : vector<2x8x128xf32>
    %6 = math.log %5 : vector<2x8x128xf32>
    %7 = arith.mulf %3, %6 : vector<2x8x128xf32>
    %cst_3 = arith.constant dense<0.000000e+00> : vector<8x128xf32>
    %8 = vector.multi_reduction <add>, %7, %cst_3 [0] : vector<2x8x128xf32> to vector<8x128xf32>
    %c0_4 = arith.constant 0 : index
    %c0_5 = arith.constant 0 : index
    %9 = vector.load %arg3[%c0_4, %c0_5] : memref<8x128xf32, #tpu.memory_space<vmem>>, vector<8x128xf32>
    tpu.vector_store %arg3[%c0_4, %c0_5], %8 {strides = array<i32>} : memref<8x128xf32, #tpu.memory_space<vmem>>, vector<8x128xf32>,
    %cst_6 = arith.constant 5.000000e-01 : f32
    %10 = vector.broadcast %cst_6 : f32 to vector<2x8x128xf32>
    %11 = arith.subf %2, %10 : vector<2x8x128xf32>
    %12 = arith.mulf %11, %11 : vector<2x8x128xf32>
    %cst_7 = arith.constant dense<0.000000e+00> : vector<8x128xf32>
    %13 = vector.multi_reduction <add>, %12, %cst_7 [0] : vector<2x8x128xf32> to vector<8x128xf32>
    %c0_8 = arith.constant 0 : index
    %c0_9 = arith.constant 0 : index
    %14 = vector.load %arg4[%c0_8, %c0_9] : memref<8x128xf32, #tpu.memory_space<vmem>>, vector<8x128xf32>
    tpu.vector_store %arg4[%c0_8, %c0_9], %13 {strides = array<i32>} : memref<8x128xf32, #tpu.memory_space<vmem>>, vector<8x128xf32>,
    return
  }
  func.func @transform_0(%arg0: i32) -> (i32, i32) {
    %c0_i32 = arith.constant 0 : i32
    %c0_i32_0 = arith.constant 0 : i32
    return %arg0, %c0_i32 : i32, i32
  }
  func.func @transform_1(%arg0: i32) -> (i32, i32) {
    %c0_i32 = arith.constant 0 : i32
    %c0_i32_0 = arith.constant 0 : i32
    return %arg0, %c0_i32 : i32, i32
  }
  func.func @transform_2(%arg0: i32) -> (i32, i32) {
    %c0_i32 = arith.constant 0 : i32
    %c0_i32_0 = arith.constant 0 : i32
    return %arg0, %c0_i32 : i32, i32
  }
  func.func @transform_3(%arg0: i32) -> (i32, i32) {
    %c0_i32 = arith.constant 0 : i32
    %c0_i32_0 = arith.constant 0 : i32
    return %arg0, %c0_i32 : i32, i32
  }
}

</mosaic_0001>

<llo_original>
// kernel: tpu_custom_call.1
$region0: #{tpu_custom_call.1}
  #allocation0 [shape = 'u32[]', space=smem, size = 0x4, offset = 0x4, fixed_abs, tag = 'smem constant byte address 0x4 - core index']
  #allocation1 [shape = 'u32[144,128]{1,0:T(1,128)}', space=vmem, size = 0x12000, scoped, tag = 'internal scratch']
  %s0 = inlined_call_operand.hbm [shape: f32[16,128], index: 0, kind: input, shape index: {}]
  %s1 = inlined_call_operand.hbm [shape: f32[16,128], index: 1, kind: input, shape index: {}]
  %s2 = inlined_call_operand.hbm [shape: f32[8,128], index: 2, kind: output, shape index: {0}]
  %s3 = inlined_call_operand.hbm [shape: f32[8,128], index: 3, kind: output, shape index: {1}]
  %4 = xla_tuple %s2, %s3
  %s5 = sld [smem:[#allocation0]]
  $region34: #{tpu_custom_call.1} parent=0
    _
  %s7 = ssub.s32 1, %s5
  %s8 = scalar_select 0, %s7, %s5
  $region1: #{tpu_custom_call.1} parent=0
    #allocation2 [shape = 'u8[8192]{0}', space=vmem, size = 0x2000, scoped, tag = 'input window, operand 0, single buffered']
    #allocation3 [shape = 's32[1]{0}', space=sflag, size = 0x4, scoped, tag = 'scoped memory for tpu_custom_call.1']
    #allocation4 [shape = 's32[1]{0}', space=sflag, size = 0x4, scoped, tag = 'scoped memory for tpu_custom_call.1']
    #allocation5 [shape = 'u8[8192]{0}', space=vmem, size = 0x2000, scoped, tag = 'input window, operand 1, single buffered']
    #allocation6 [shape = 's32[1]{0}', space=sflag, size = 0x4, scoped, tag = 'scoped memory for tpu_custom_call.1']
    #allocation7 [shape = 'u8[4096]{0}', space=vmem, size = 0x1000, scoped, tag = 'output window, operand 0, single buffered']
    #allocation8 [shape = 'u8[4096]{0}', space=vmem, size = 0x1000, scoped, tag = 'output window, operand 1, single buffered']
    #allocation9 [shape = 's32[1]{0}', space=sflag, size = 0x4, scoped, tag = 'scoped memory for tpu_custom_call.1']
    %9 = vsyncpa [#allocation3], 0
    %10 = vsyncpa [#allocation6], 0
    %11 = vsyncpa [#allocation4], 0
    %12 = vsyncpa [#allocation9], 0
    // Predicated region
    $region2: #{tpu_custom_call.1} parent=1 // pred_check
      _
    $region3: #{tpu_custom_call.1} parent=1 // pred_check_branch
      %14 = sbr.rel (0) target = $region5
    $region4: #{tpu_custom_call.1} parent=1 // pred_region
      %s16 = ssub.s32 256, 256
      %17 = vsyncadd [#allocation3], %s16
      %s18 = sshll.u32 [#allocation2], 4
      %s19 = int_to_ptr.vmem [resolvable:$true] %s18
      %24 = dma.hbm_to_vmem [thread:$0]  %s0, 256, %s19, [#allocation3], 128, 128, 8
    $region5: #{tpu_custom_call.1} parent=1 // pred_fallthru
      _
    // Predicated region
    $region6: #{tpu_custom_call.1} parent=1 // pred_check
      _
    $region7: #{tpu_custom_call.1} parent=1 // pred_check_branch
      %26 = sbr.rel (0) target = $region9
    $region8: #{tpu_custom_call.1} parent=1 // pred_region
      %s28 = ssub.s32 256, 256
      %29 = vsyncadd [#allocation6], %s28
      %s30 = sshll.u32 [#allocation5], 4
      %s31 = int_to_ptr.vmem [resolvable:$true] %s30
      %36 = dma.hbm_to_vmem [thread:$0]  %s1, 256, %s31, [#allocation6], 128, 128, 8
    $region9: #{tpu_custom_call.1} parent=1 // pred_fallthru
      _
    // Predicated region
    $region10: #{tpu_custom_call.1} parent=1 // pred_check
      _
    $region11: #{tpu_custom_call.1} parent=1 // pred_check_branch
      %38 = sbr.rel (0) target = $region13
    $region12: #{tpu_custom_call.1} parent=1 // pred_region
      %39 = dma.done [#allocation3], 256
    $region13: #{tpu_custom_call.1} parent=1 // pred_fallthru
      _
    // Predicated region
    $region14: #{tpu_custom_call.1} parent=1 // pred_check
      _
    $region15: #{tpu_custom_call.1} parent=1 // pred_check_branch
      %41 = sbr.rel (0) target = $region17
    $region16: #{tpu_custom_call.1} parent=1 // pred_region
      %42 = dma.done [#allocation6], 256
    $region17: #{tpu_custom_call.1} parent=1 // pred_fallthru
      _
    %v43 = vld [vmem:[#allocation2] sm:$0xff]
    %v44 = vld [vmem:[#allocation2 + $0x8] sm:$0xff]
    %v45 = vld [vmem:[#allocation5] sm:$0xff]
    %v46 = vld [vmem:[#allocation5 + $0x8] sm:$0xff]
    %v47 = vadd.f32 %v43, 1e-10
    %v48 = vadd.f32 %v44, 1e-10
    %v49 = vlog2.pop %v47
    %v50 = vmul.f32 %v49, 0.6931472
    %v51 = vlog2.pop %v48
    %v52 = vmul.f32 %v51, 0.6931472
    %v53 = vmul.f32 %v45, %v50
    %v54 = vmul.f32 %v46, %v52
    %v55 = vadd.f32 %v53, %v54
    %56 = vst [vmem:[#allocation7] sm:$0xff] %v55
    %v57 = vsub.f32 %v43, 0.5
    %v58 = vsub.f32 %v44, 0.5
    %v59 = vmul.f32 %v57, %v57
    %v60 = vmul.f32 %v58, %v58
    %v61 = vadd.f32 %v59, %v60
    %62 = vst [vmem:[#allocation8] sm:$0xff] %v61
    // Predicated region
    $region18: #{tpu_custom_call.1} parent=1 // pred_check
      _
    $region19: #{tpu_custom_call.1} parent=1 // pred_check_branch
      %64 = sbr.rel (0) target = $region21
    $region20: #{tpu_custom_call.1} parent=1 // pred_region
      %s66 = ssub.s32 128, 128
      %67 = vsyncadd [#allocation4], %s66
      %s69 = sshll.u32 [#allocation7], 4
      %s70 = int_to_ptr.vmem [resolvable:$true] %s69
      %72 = dma.vmem_to_hbm [thread:$0]  %s70, 128, %s2, [#allocation4]
    $region21: #{tpu_custom_call.1} parent=1 // pred_fallthru
      _
    // Predicated region
    $region22: #{tpu_custom_call.1} parent=1 // pred_check
      _
    $region23: #{tpu_custom_call.1} parent=1 // pred_check_branch
      %74 = sbr.rel (0) target = $region25
    $region24: #{tpu_custom_call.1} parent=1 // pred_region
      %s76 = ssub.s32 128, 128
      %77 = vsyncadd [#allocation9], %s76
      %s79 = sshll.u32 [#allocation8], 4
      %s80 = int_to_ptr.vmem [resolvable:$true] %s79
      %82 = dma.vmem_to_hbm [thread:$0]  %s80, 128, %s3, [#allocation9]
    $region25: #{tpu_custom_call.1} parent=1 // pred_fallthru
      _
    // Predicated region
    $region26: #{tpu_custom_call.1} parent=1 // pred_check
      _
    $region27: #{tpu_custom_call.1} parent=1 // pred_check_branch
      %84 = sbr.rel (0) target = $region29
    $region28: #{tpu_custom_call.1} parent=1 // pred_region
      %85 = dma.done [#allocation4], 128
    $region29: #{tpu_custom_call.1} parent=1 // pred_fallthru
      _
    // Predicated region
    $region30: #{tpu_custom_call.1} parent=1 // pred_check
      _
    $region31: #{tpu_custom_call.1} parent=1 // pred_check_branch
      %87 = sbr.rel (0) target = $region33
    $region32: #{tpu_custom_call.1} parent=1 // pred_region
      %88 = dma.done [#allocation9], 128
    $region33: #{tpu_custom_call.1} parent=1 // pred_fallthru
      _
    %89 = vsyncpa [#allocation3], 1
    %90 = vsyncpa [#allocation6], 1
    %91 = vsyncpa [#allocation4], 1
    %92 = vsyncpa [#allocation9], 1

</llo_original>
